<compile_context>
chip_gen: v6e
topology: v6e:2x2x1
jax: 0.10.0
libtpu: 0.0.40
codegen_flags: <defaults>
</compile_context>

<pallas_src>
import functools

import numpy as np
import jax
import jax.numpy as jnp
from jax.experimental import pallas as pl
from jax.experimental.pallas import tpu as pltpu

BN_EPS = 1e-5


# --------------------------------------------------------------------------
# In-kernel helpers (traced inside the Pallas kernel body).
# --------------------------------------------------------------------------
def _bn_relu(v, gamma, beta, sel, expand, inv_count, R, C, extra=None):
    """Training-mode BatchNorm (biased batch stats) + ReLU on a (R, L) slab.

    One MXU dot for the per-channel stats ([v; v*v] stacked along rows) and
    one tiny (k, C)x(C, L) dot broadcasting scale/shift (and an optional
    extra per-channel row, e.g. the next conv's bias) back to lanes.
    """
    stacked = jnp.concatenate([v, v * v], axis=0)                    # (2R, L)
    cs = jnp.dot(stacked, sel, preferred_element_type=jnp.float32)   # (2R, C)
    s1 = jnp.sum(cs[:R], axis=0, keepdims=True)                      # (1, C)
    s2 = jnp.sum(cs[R:], axis=0, keepdims=True)                      # (1, C)
    mean = s1 * inv_count
    var = s2 * inv_count - mean * mean           # E[x^2] - mean^2 (biased)
    scale = gamma * jax.lax.rsqrt(var + BN_EPS)                      # (1, C)
    shift = beta - mean * scale                                      # (1, C)
    parts = [scale, shift] if extra is None else [scale, shift, extra]
    rows = jnp.dot(jnp.concatenate(parts, axis=0), expand,
                   preferred_element_type=jnp.float32)               # (k, L)
    act = jnp.maximum(v * rows[0:1, :] + rows[1:2, :], 0.0)
    return act, (rows[2:3, :] if extra is not None else None)


def _conv_im2row(pad_ref, t_ref, bias_row, *, N, HG, L, n_taps, off, G):
    """One conv as a single im2row matmul: (R, n_taps*L) x (n_taps*L, L)."""
    windows = [pad_ref[:, off - G + t:off - G + t + HG, :].reshape(N * HG, L)
               for t in range(n_taps)]
    lhs = windows[0] if n_taps == 1 else jnp.concatenate(windows, axis=-1)
    out = jnp.dot(lhs, t_ref[...], preferred_element_type=jnp.float32)
    return out if bias_row is None else out + bias_row


def _resblock_kernel(x_ref, t1_ref, t2_ref, b2_ref, g1_ref, be1_ref,
                     g2_ref, be2_ref, sel_ref, exp_ref, o_ref, pad_ref, *,
                     N, HG, L, C, G, n_taps, off, inv_count):
    R = N * HG
    sel = sel_ref[...]                                               # (L, C)
    expand = exp_ref[...]                                            # (C, L)
    conv = functools.partial(_conv_im2row, N=N, HG=HG, L=L,
                             n_taps=n_taps, off=off, G=G)

    # Zero only the halo rows (once; shared by both convs -- the interior is
    # always fully overwritten before each conv).
    halo = jnp.zeros((N, G, L), jnp.float32)
    pad_ref[:, off - G:off, :] = halo
    pad_ref[:, off + HG:off + HG + G, :] = halo

    # ---- stage 1: BN1 (batch stats) + ReLU + conv1 -----------------------
    x = x_ref[...].astype(jnp.float32)                               # (R, L)
    y1, _ = _bn_relu(x, g1_ref[...], be1_ref[...], sel, expand,
                     inv_count, R, C)
    pad_ref[:, off:off + HG, :] = y1.reshape(N, HG, L)   # sublane-aligned vst
    # conv1 bias dropped: a per-channel constant is exactly removed by BN2's
    # training-mode mean subtraction, so it cannot affect the output.
    h = conv(pad_ref, t1_ref, None)                                  # (R, L)

    # ---- stage 2: BN2 (stats on h, which never leaves VMEM) + ReLU + conv2
    y2, bias2_row = _bn_relu(h, g2_ref[...], be2_ref[...], sel, expand,
                             inv_count, R, C, extra=b2_ref[...])
    pad_ref[:, off:off + HG, :] = y2.reshape(N, HG, L)
    out = conv(pad_ref, t2_ref, bias2_row)
    o_ref[...] = out.astype(o_ref.dtype)                             # (R, 128)


# --------------------------------------------------------------------------
# Wrapper-side constant factories.
# --------------------------------------------------------------------------
def _band_placement(KH, KW, W, P, n_taps):
    """0/1 tensor placing w[kh,kw] into the 2-row-packed block-banded form."""
    G = n_taps // 2
    a = np.arange(KH).reshape(KH, 1, 1, 1, 1, 1, 1)          # kh
    b = np.arange(KW).reshape(1, KW, 1, 1, 1, 1, 1)          # kw
    t = np.arange(n_taps).reshape(1, 1, n_taps, 1, 1, 1, 1)  # group tap
    u = np.arange(2).reshape(1, 1, 1, 2, 1, 1, 1)            # input row-in-group
    v = np.arange(W).reshape(1, 1, 1, 1, W, 1, 1)            # input col
    p = np.arange(2).reshape(1, 1, 1, 1, 1, 2, 1)            # output row-in-group
    q = np.arange(W).reshape(1, 1, 1, 1, 1, 1, W)            # output col
    hit = (a == 2 * (t - G) + u - p + P) & (b == v - q + P)
    return hit.astype(np.float32)        # (KH, KW, n_taps, 2, W, 2, W)


def _band_weights(w_hwio, placement, C):
    """Block-banded weights (n_taps*2*W*C, 2*W*C) via ONE einsum (no scatter)."""
    n_taps, W = placement.shape[2], placement.shape[4]
    t = jnp.einsum('abio,abtuvpq->tuvipqo',
                   w_hwio.astype(jnp.float32), jnp.asarray(placement))
    L = 2 * W * C
    # TODO(synk): for large W, tile W into 128-lane strips (block-banded) to
    # avoid the dense O(W^2 C^2) banded matrix.
    return t.reshape(n_taps * L, L)


def fused_resblock2d(x_nhwc, w1, b1, g1, be1, w2, b2, g2, be2, padding):
    # b1 is accepted for interface parity but unused: exactly cancelled by
    # BN2's batch-mean subtraction (see kernel comment).
    del b1
    N, H, W, C = x_nhwc.shape
    KH, KW, ci, co = w1.shape
    assert ci == C and co == C and w2.shape == w1.shape
    P = int(padding)
    # ResBlock2d "preserves spatial resolution" => stride 1, 2P == K-1.
    assert KH == KW and 2 * P == KH - 1, "spatial-preserving conv expected"
    assert H % 2 == 0, "H must be even for the 2-row lane packing"
    # TODO(synk): non-resolution-preserving configs would need per-stage
    # packing / halo sizes.

    HG = H // 2                       # packed row-groups per image
    L = 2 * W * C                     # lanes (=128 for W=16, C=4)
    R = N * HG                        # packed rows
    G = (P + 1) // 2                  # group halo on each side
    n_taps = 2 * G + 1                # group taps per conv
    off = max(8, ((G + 7) // 8) * 8)  # interior starts at a sublane-aligned row
    inv_count = 1.0 / float(N * H * W)

    x2d = x_nhwc.reshape(R, L).astype(jnp.float32)   # pure layout plumbing

    placement = _band_placement(KH, KW, W, P, n_taps)
    t1 = _band_weights(w1, placement, C)             # (n_taps*L, L)
    t2 = _band_weights(w2, placement, C)
    # TODO(synk): on v6e/v7x, cast t1/t2 + the conv lhs to bf16 (MXU-native).

    sel = jnp.asarray(np.tile(np.eye(C, dtype=np.float32), (2 * W, 1)))  # (L,C)
    expand = sel.T                                                       # (C,L)
    row = lambda v: jnp.asarray(v, jnp.float32).reshape(1, C)

    def full_spec(shape):
        return pl.BlockSpec(shape, lambda i: (0,) * len(shape))

    kernel = functools.partial(_resblock_kernel, N=N, HG=HG, L=L, C=C, G=G,
                               n_taps=n_taps, off=off, inv_count=inv_count)

    out2d = pl.pallas_call(
        kernel,
        out_shape=jax.ShapeDtypeStruct((R, L), x_nhwc.dtype),
        grid_spec=pltpu.PrefetchScalarGridSpec(
            num_scalar_prefetch=0,
            grid=(1,),   # whole batch one step; working set well under VMEM
            in_specs=[
                full_spec((R, L)),               # x (2-row packed, 128 lanes)
                full_spec((n_taps * L, L)),      # block-banded conv1 weights
                full_spec((n_taps * L, L)),      # block-banded conv2 weights
                full_spec((1, C)),               # conv2 bias
                full_spec((1, C)),               # gamma1
                full_spec((1, C)),               # beta1
                full_spec((1, C)),               # gamma2
                full_spec((1, C)),               # beta2
                full_spec((L, C)),               # channel-sum selector
                full_spec((C, L)),               # channel->lane expander
            ],
            out_specs=full_spec((R, L)),
            scratch_shapes=[
                pltpu.VMEM((N, off + HG + G, L), jnp.float32),  # H-halo slab
            ],
        ),
        compiler_params=pltpu.CompilerParams(
            dimension_semantics=("arbitrary",)),
    )(x2d, t1, t2, row(b2), row(g1), row(be1), row(g2), row(be2), sel, expand)
    # TODO(synk): when scaling H/W/C, tile H into per-TensorCore strips with a
    # (KH-1) halo (v7x: 2 TCs, 64 MiB VMEM; cross-core BN reduction) and set
    # vmem_limit_bytes for v5e's 16 MiB scoped default.
    return out2d.reshape(N, H, W, C)


def resblock2d_forward(x_nchw, params, padding):
    """Matches ResBlock2d.forward: conv2(relu(bn2(conv1(relu(bn1(x))))))."""
    x = jnp.transpose(x_nchw, (0, 2, 3, 1))          # NCHW -> NHWC
    out = fused_resblock2d(
        x, params["w1"], params["b1"], params["gamma1"], params["beta1"],
        params["w2"], params["b2"], params["gamma2"], params["beta2"],
        padding)
    return jnp.transpose(out, (0, 3, 1, 2))          # NHWC -> NCHW


def resblock2d_reference(x_nchw, params, padding):
    """Pure-JAX reference (sanity check); keeps both conv biases."""
    x = jnp.transpose(x_nchw, (0, 2, 3, 1))

    def bn_relu(h, g, b):
        m = jnp.mean(h, axis=(0, 1, 2))
        v = jnp.mean(jnp.square(h - m), axis=(0, 1, 2))
        return jnp.maximum((h - m) / jnp.sqrt(v + BN_EPS) * g + b, 0.0)

    def conv(h, w, b):
        y = jax.lax.conv_general_dilated(
            h, w, (1, 1), [(padding, padding), (padding, padding)],
            dimension_numbers=("NHWC", "HWIO", "NHWC"))
        return y + b.reshape(-1)

    h = conv(bn_relu(x, params["gamma1"], params["beta1"]),
             params["w1"], params["b1"])
    o = conv(bn_relu(h, params["gamma2"], params["beta2"]),
             params["w2"], params["b2"])
    return jnp.transpose(o, (0, 3, 1, 2))


if __name__ == "__main__":
    # in_features=4, kernel_size=3, padding=1 (preserves spatial resolution).
    N, C, H, W = 2, 4, 16, 16
    K, P = 3, 1

    keys = jax.random.split(jax.random.PRNGKey(0), 9)
    x = jax.random.normal(keys[0], (N, C, H, W), jnp.float32)

    params = {
        # conv weights in HWIO layout (PyTorch OIHW weights -> transpose (2,3,1,0))
        "w1": 0.1 * jax.random.normal(keys[1], (K, K, C, C), jnp.float32),
        "b1": 0.1 * jax.random.normal(keys[2], (1, C), jnp.float32),
        "w2": 0.1 * jax.random.normal(keys[3], (K, K, C, C), jnp.float32),
        "b2": 0.1 * jax.random.normal(keys[4], (1, C), jnp.float32),
        "gamma1": 1.0 + 0.1 * jax.random.normal(keys[5], (C,), jnp.float32),
        "beta1": 0.1 * jax.random.normal(keys[6], (C,), jnp.float32),
        "gamma2": 1.0 + 0.1 * jax.random.normal(keys[7], (C,), jnp.float32),
        "beta2": 0.1 * jax.random.normal(keys[8], (C,), jnp.float32),
    }

    fwd = jax.jit(functools.partial(resblock2d_forward, padding=P))
    out = jax.block_until_ready(fwd(x, params))

    ref = resblock2d_reference(x, params, P)
    assert out.shape == (N, C, H, W), out.shape
    assert jnp.allclose(out, ref, atol=5e-2, rtol=5e-2), "mismatch vs reference"

    print("KERNEL_OK")
</pallas_src>

<mosaic_0001>
module attributes {stable_mosaic.version = 11 : i64} {
  func.func @_resblock_kernel(%arg0: i32, %arg1: memref<16x128xf32, #tpu.memory_space<vmem>>, %arg2: memref<384x128xf32, #tpu.memory_space<vmem>>, %arg3: memref<384x128xf32, #tpu.memory_space<vmem>>, %arg4: memref<1x4xf32, #tpu.memory_space<vmem>>, %arg5: memref<1x4xf32, #tpu.memory_space<vmem>>, %arg6: memref<1x4xf32, #tpu.memory_space<vmem>>, %arg7: memref<1x4xf32, #tpu.memory_space<vmem>>, %arg8: memref<1x4xf32, #tpu.memory_space<vmem>>, %arg9: memref<128x4xf32, #tpu.memory_space<vmem>>, %arg10: memref<4x128xf32, #tpu.memory_space<vmem>>, %arg11: memref<16x128xf32, #tpu.memory_space<vmem>>, %arg12: memref<2x17x128xf32, #tpu.memory_space<vmem>>) attributes {dimension_semantics = [#tpu.dimension_semantics<arbitrary>], iteration_bounds = array<i64: 1>, scalar_prefetch = 0 : i64, scratch_operands = 1 : i64, tpu.core_type = #tpu.core_type<tc>, window_params = [{pipeline_mode = #tpu.pipeline_mode<synchronous>, transform_indices = @transform_0, window_bounds = array<i64: 16, 128>}, {pipeline_mode = #tpu.pipeline_mode<synchronous>, transform_indices = @transform_1, window_bounds = array<i64: 384, 128>}, {pipeline_mode = #tpu.pipeline_mode<synchronous>, transform_indices = @transform_2, window_bounds = array<i64: 384, 128>}, {pipeline_mode = #tpu.pipeline_mode<synchronous>, transform_indices = @transform_3, window_bounds = array<i64: 1, 4>}, {pipeline_mode = #tpu.pipeline_mode<synchronous>, transform_indices = @transform_4, window_bounds = array<i64: 1, 4>}, {pipeline_mode = #tpu.pipeline_mode<synchronous>, transform_indices = @transform_5, window_bounds = array<i64: 1, 4>}, {pipeline_mode = #tpu.pipeline_mode<synchronous>, transform_indices = @transform_6, window_bounds = array<i64: 1, 4>}, {pipeline_mode = #tpu.pipeline_mode<synchronous>, transform_indices = @transform_7, window_bounds = array<i64: 1, 4>}, {pipeline_mode = #tpu.pipeline_mode<synchronous>, transform_indices = @transform_8, window_bounds = array<i64: 128, 4>}, {pipeline_mode = #tpu.pipeline_mode<synchronous>, transform_indices = @transform_9, window_bounds = array<i64: 4, 128>}, {pipeline_mode = #tpu.pipeline_mode<synchronous>, transform_indices = @transform_10, window_bounds = array<i64: 16, 128>}]} {
    %c0 = arith.constant 0 : index
    %c0_0 = arith.constant 0 : index
    %0 = vector.load %arg9[%c0, %c0_0] : memref<128x4xf32, #tpu.memory_space<vmem>>, vector<128x4xf32>
    %c0_1 = arith.constant 0 : index
    %c0_2 = arith.constant 0 : index
    %1 = vector.load %arg10[%c0_1, %c0_2] : memref<4x128xf32, #tpu.memory_space<vmem>>, vector<4x128xf32>
    %cst = arith.constant 0.000000e+00 : f32
    %2 = vector.broadcast %cst : f32 to vector<2x1x128xf32>
    %c0_3 = arith.constant 0 : index
    %c7 = arith.constant 7 : index
    %c0_4 = arith.constant 0 : index
    %3 = vector.load %arg12[%c0_3, %c7, %c0_4] : memref<2x17x128xf32, #tpu.memory_space<vmem>>, vector<2x1x128xf32>
    tpu.vector_store %arg12[%c0_3, %c7, %c0_4], %2 {strides = array<i32>} : memref<2x17x128xf32, #tpu.memory_space<vmem>>, vector<2x1x128xf32>,
    %c0_5 = arith.constant 0 : index
    %c16 = arith.constant 16 : index
    %c0_6 = arith.constant 0 : index
    %4 = vector.load %arg12[%c0_5, %c16, %c0_6] : memref<2x17x128xf32, #tpu.memory_space<vmem>>, vector<2x1x128xf32>
    tpu.vector_store %arg12[%c0_5, %c16, %c0_6], %2 {strides = array<i32>} : memref<2x17x128xf32, #tpu.memory_space<vmem>>, vector<2x1x128xf32>,
    %c0_7 = arith.constant 0 : index
    %c0_8 = arith.constant 0 : index
    %5 = vector.load %arg1[%c0_7, %c0_8] : memref<16x128xf32, #tpu.memory_space<vmem>>, vector<16x128xf32>
    %c0_9 = arith.constant 0 : index
    %c0_10 = arith.constant 0 : index
    %6 = vector.load %arg5[%c0_9, %c0_10] : memref<1x4xf32, #tpu.memory_space<vmem>>, vector<1x4xf32>
    %c0_11 = arith.constant 0 : index
    %c0_12 = arith.constant 0 : index
    %7 = vector.load %arg6[%c0_11, %c0_12] : memref<1x4xf32, #tpu.memory_space<vmem>>, vector<1x4xf32>
    %8 = arith.mulf %5, %5 : vector<16x128xf32>
    %9 = tpu.concatenate %5, %8 in 0 : vector<16x128xf32>, vector<16x128xf32> -> vector<32x128xf32>
    %cst_13 = arith.constant dense<0.000000e+00> : vector<32x4xf32>
    %10 = tpu.matmul %9, %0, %cst_13 {dimension_numbers = #tpu.dot_dimension_numbers<[1], [0], [0], [1], [0, 0, 1, 1], [], []>} : vector<32x128xf32>, vector<128x4xf32>, vector<32x4xf32> -> vector<32x4xf32>
    %11 = vector.extract_strided_slice %10 {offsets = [0, 0], sizes = [16, 4], strides = [1, 1]} : vector<32x4xf32> to vector<16x4xf32>
    %cst_14 = arith.constant dense<0.000000e+00> : vector<4xf32>
    %12 = vector.multi_reduction <add>, %11, %cst_14 [0] : vector<16x4xf32> to vector<4xf32>
    %13 = vector.shape_cast %12 : vector<4xf32> to vector<1x4xf32>
    %14 = vector.extract_strided_slice %10 {offsets = [16, 0], sizes = [16, 4], strides = [1, 1]} : vector<32x4xf32> to vector<16x4xf32>
    %cst_15 = arith.constant dense<0.000000e+00> : vector<4xf32>
    %15 = vector.multi_reduction <add>, %14, %cst_15 [0] : vector<16x4xf32> to vector<4xf32>
    %16 = vector.shape_cast %15 : vector<4xf32> to vector<1x4xf32>
    %cst_16 = arith.constant 0.001953125 : f32
    %17 = vector.broadcast %cst_16 : f32 to vector<1x4xf32>
    %18 = arith.mulf %13, %17 : vector<1x4xf32>
    %cst_17 = arith.constant 0.001953125 : f32
    %19 = vector.broadcast %cst_17 : f32 to vector<1x4xf32>
    %20 = arith.mulf %16, %19 : vector<1x4xf32>
    %21 = arith.mulf %18, %18 : vector<1x4xf32>
    %22 = arith.subf %20, %21 : vector<1x4xf32>
    %cst_18 = arith.constant 9.99999974E-6 : f32
    %23 = vector.broadcast %cst_18 : f32 to vector<1x4xf32>
    %24 = arith.addf %22, %23 : vector<1x4xf32>
    %25 = math.rsqrt %24 : vector<1x4xf32>
    %26 = arith.mulf %6, %25 : vector<1x4xf32>
    %27 = arith.mulf %18, %26 : vector<1x4xf32>
    %28 = arith.subf %7, %27 : vector<1x4xf32>
    %29 = tpu.concatenate %26, %28 in 0 : vector<1x4xf32>, vector<1x4xf32> -> vector<2x4xf32>
    %cst_19 = arith.constant dense<0.000000e+00> : vector<2x128xf32>
    %30 = tpu.matmul %29, %1, %cst_19 {dimension_numbers = #tpu.dot_dimension_numbers<[1], [0], [0], [1], [0, 0, 1, 1], [], []>} : vector<2x4xf32>, vector<4x128xf32>, vector<2x128xf32> -> vector<2x128xf32>
    %31 = vector.extract_strided_slice %30 {offsets = [0, 0], sizes = [1, 128], strides = [1, 1]} : vector<2x128xf32> to vector<1x128xf32>
    %32 = vector.broadcast %31 : vector<1x128xf32> to vector<16x128xf32>
    %33 = arith.mulf %5, %32 : vector<16x128xf32>
    %34 = vector.extract_strided_slice %30 {offsets = [1, 0], sizes = [1, 128], strides = [1, 1]} : vector<2x128xf32> to vector<1x128xf32>
    %35 = vector.broadcast %34 : vector<1x128xf32> to vector<16x128xf32>
    %36 = arith.addf %33, %35 : vector<16x128xf32>
    %cst_20 = arith.constant 0.000000e+00 : f32
    %37 = vector.broadcast %cst_20 : f32 to vector<16x128xf32>
    %38 = arith.maximumf %36, %37 : vector<16x128xf32>
    %39 = vector.shape_cast %38 : vector<16x128xf32> to vector<2x8x128xf32>
    %c0_21 = arith.constant 0 : index
    %c8 = arith.constant 8 : index
    %c0_22 = arith.constant 0 : index
    %40 = vector.load %arg12[%c0_21, %c8, %c0_22] : memref<2x17x128xf32, #tpu.memory_space<vmem>>, vector<2x8x128xf32>
    tpu.vector_store %arg12[%c0_21, %c8, %c0_22], %39 {strides = array<i32>} : memref<2x17x128xf32, #tpu.memory_space<vmem>>, vector<2x8x128xf32>,
    %c0_23 = arith.constant 0 : index
    %c7_24 = arith.constant 7 : index
    %c0_25 = arith.constant 0 : index
    %41 = vector.load %arg12[%c0_23, %c7_24, %c0_25] : memref<2x17x128xf32, #tpu.memory_space<vmem>>, vector<2x8x128xf32>
    %42 = vector.shape_cast %41 : vector<2x8x128xf32> to vector<16x128xf32>
    %c0_26 = arith.constant 0 : index
    %c8_27 = arith.constant 8 : index
    %c0_28 = arith.constant 0 : index
    %43 = vector.load %arg12[%c0_26, %c8_27, %c0_28] : memref<2x17x128xf32, #tpu.memory_space<vmem>>, vector<2x8x128xf32>
    %44 = vector.shape_cast %43 : vector<2x8x128xf32> to vector<16x128xf32>
    %c0_29 = arith.constant 0 : index
    %c9 = arith.constant 9 : index
    %c0_30 = arith.constant 0 : index
    %45 = vector.load %arg12[%c0_29, %c9, %c0_30] : memref<2x17x128xf32, #tpu.memory_space<vmem>>, vector<2x8x128xf32>
    %46 = vector.shape_cast %45 : vector<2x8x128xf32> to vector<16x128xf32>
    %47 = tpu.concatenate %42, %44, %46 in 1 : vector<16x128xf32>, vector<16x128xf32>, vector<16x128xf32> -> vector<16x384xf32>
    %c0_31 = arith.constant 0 : index
    %c0_32 = arith.constant 0 : index
    %48 = vector.load %arg2[%c0_31, %c0_32] : memref<384x128xf32, #tpu.memory_space<vmem>>, vector<384x128xf32>
    %cst_33 = arith.constant dense<0.000000e+00> : vector<16x128xf32>
    %49 = tpu.matmul %47, %48, %cst_33 {dimension_numbers = #tpu.dot_dimension_numbers<[1], [0], [0], [1], [0, 0, 1, 1], [], []>} : vector<16x384xf32>, vector<384x128xf32>, vector<16x128xf32> -> vector<16x128xf32>
    %c0_34 = arith.constant 0 : index
    %c0_35 = arith.constant 0 : index
    %50 = vector.load %arg7[%c0_34, %c0_35] : memref<1x4xf32, #tpu.memory_space<vmem>>, vector<1x4xf32>
    %c0_36 = arith.constant 0 : index
    %c0_37 = arith.constant 0 : index
    %51 = vector.load %arg8[%c0_36, %c0_37] : memref<1x4xf32, #tpu.memory_space<vmem>>, vector<1x4xf32>
    %c0_38 = arith.constant 0 : index
    %c0_39 = arith.constant 0 : index
    %52 = vector.load %arg4[%c0_38, %c0_39] : memref<1x4xf32, #tpu.memory_space<vmem>>, vector<1x4xf32>
    %53 = arith.mulf %49, %49 : vector<16x128xf32>
    %54 = tpu.concatenate %49, %53 in 0 : vector<16x128xf32>, vector<16x128xf32> -> vector<32x128xf32>
    %cst_40 = arith.constant dense<0.000000e+00> : vector<32x4xf32>
    %55 = tpu.matmul %54, %0, %cst_40 {dimension_numbers = #tpu.dot_dimension_numbers<[1], [0], [0], [1], [0, 0, 1, 1], [], []>} : vector<32x128xf32>, vector<128x4xf32>, vector<32x4xf32> -> vector<32x4xf32>
    %56 = vector.extract_strided_slice %55 {offsets = [0, 0], sizes = [16, 4], strides = [1, 1]} : vector<32x4xf32> to vector<16x4xf32>
    %cst_41 = arith.constant dense<0.000000e+00> : vector<4xf32>
    %57 = vector.multi_reduction <add>, %56, %cst_41 [0] : vector<16x4xf32> to vector<4xf32>
    %58 = vector.shape_cast %57 : vector<4xf32> to vector<1x4xf32>
    %59 = vector.extract_strided_slice %55 {offsets = [16, 0], sizes = [16, 4], strides = [1, 1]} : vector<32x4xf32> to vector<16x4xf32>
    %cst_42 = arith.constant dense<0.000000e+00> : vector<4xf32>
    %60 = vector.multi_reduction <add>, %59, %cst_42 [0] : vector<16x4xf32> to vector<4xf32>
    %61 = vector.shape_cast %60 : vector<4xf32> to vector<1x4xf32>
    %cst_43 = arith.constant 0.001953125 : f32
    %62 = vector.broadcast %cst_43 : f32 to vector<1x4xf32>
    %63 = arith.mulf %58, %62 : vector<1x4xf32>
    %cst_44 = arith.constant 0.001953125 : f32
    %64 = vector.broadcast %cst_44 : f32 to vector<1x4xf32>
    %65 = arith.mulf %61, %64 : vector<1x4xf32>
    %66 = arith.mulf %63, %63 : vector<1x4xf32>
    %67 = arith.subf %65, %66 : vector<1x4xf32>
    %cst_45 = arith.constant 9.99999974E-6 : f32
    %68 = vector.broadcast %cst_45 : f32 to vector<1x4xf32>
    %69 = arith.addf %67, %68 : vector<1x4xf32>
    %70 = math.rsqrt %69 : vector<1x4xf32>
    %71 = arith.mulf %50, %70 : vector<1x4xf32>
    %72 = arith.mulf %63, %71 : vector<1x4xf32>
    %73 = arith.subf %51, %72 : vector<1x4xf32>
    %74 = tpu.concatenate %71, %73, %52 in 0 : vector<1x4xf32>, vector<1x4xf32>, vector<1x4xf32> -> vector<3x4xf32>
    %cst_46 = arith.constant dense<0.000000e+00> : vector<3x128xf32>
    %75 = tpu.matmul %74, %1, %cst_46 {dimension_numbers = #tpu.dot_dimension_numbers<[1], [0], [0], [1], [0, 0, 1, 1], [], []>} : vector<3x4xf32>, vector<4x128xf32>, vector<3x128xf32> -> vector<3x128xf32>
    %76 = vector.extract_strided_slice %75 {offsets = [0, 0], sizes = [1, 128], strides = [1, 1]} : vector<3x128xf32> to vector<1x128xf32>
    %77 = vector.broadcast %76 : vector<1x128xf32> to vector<16x128xf32>
    %78 = arith.mulf %49, %77 : vector<16x128xf32>
    %79 = vector.extract_strided_slice %75 {offsets = [1, 0], sizes = [1, 128], strides = [1, 1]} : vector<3x128xf32> to vector<1x128xf32>
    %80 = vector.broadcast %79 : vector<1x128xf32> to vector<16x128xf32>
    %81 = arith.addf %78, %80 : vector<16x128xf32>
    %cst_47 = arith.constant 0.000000e+00 : f32
    %82 = vector.broadcast %cst_47 : f32 to vector<16x128xf32>
    %83 = arith.maximumf %81, %82 : vector<16x128xf32>
    %84 = vector.extract_strided_slice %75 {offsets = [2, 0], sizes = [1, 128], strides = [1, 1]} : vector<3x128xf32> to vector<1x128xf32>
    %85 = vector.shape_cast %83 : vector<16x128xf32> to vector<2x8x128xf32>
    %c0_48 = arith.constant 0 : index
    %c8_49 = arith.constant 8 : index
    %c0_50 = arith.constant 0 : index
    %86 = vector.load %arg12[%c0_48, %c8_49, %c0_50] : memref<2x17x128xf32, #tpu.memory_space<vmem>>, vector<2x8x128xf32>
    tpu.vector_store %arg12[%c0_48, %c8_49, %c0_50], %85 {strides = array<i32>} : memref<2x17x128xf32, #tpu.memory_space<vmem>>, vector<2x8x128xf32>,
    %c0_51 = arith.constant 0 : index
    %c7_52 = arith.constant 7 : index
    %c0_53 = arith.constant 0 : index
    %87 = vector.load %arg12[%c0_51, %c7_52, %c0_53] : memref<2x17x128xf32, #tpu.memory_space<vmem>>, vector<2x8x128xf32>
    %88 = vector.shape_cast %87 : vector<2x8x128xf32> to vector<16x128xf32>
    %c0_54 = arith.constant 0 : index
    %c8_55 = arith.constant 8 : index
    %c0_56 = arith.constant 0 : index
    %89 = vector.load %arg12[%c0_54, %c8_55, %c0_56] : memref<2x17x128xf32, #tpu.memory_space<vmem>>, vector<2x8x128xf32>
    %90 = vector.shape_cast %89 : vector<2x8x128xf32> to vector<16x128xf32>
    %c0_57 = arith.constant 0 : index
    %c9_58 = arith.constant 9 : index
    %c0_59 = arith.constant 0 : index
    %91 = vector.load %arg12[%c0_57, %c9_58, %c0_59] : memref<2x17x128xf32, #tpu.memory_space<vmem>>, vector<2x8x128xf32>
    %92 = vector.shape_cast %91 : vector<2x8x128xf32> to vector<16x128xf32>
    %93 = tpu.concatenate %88, %90, %92 in 1 : vector<16x128xf32>, vector<16x128xf32>, vector<16x128xf32> -> vector<16x384xf32>
    %c0_60 = arith.constant 0 : index
    %c0_61 = arith.constant 0 : index
    %94 = vector.load %arg3[%c0_60, %c0_61] : memref<384x128xf32, #tpu.memory_space<vmem>>, vector<384x128xf32>
    %cst_62 = arith.constant dense<0.000000e+00> : vector<16x128xf32>
    %95 = tpu.matmul %93, %94, %cst_62 {dimension_numbers = #tpu.dot_dimension_numbers<[1], [0], [0], [1], [0, 0, 1, 1], [], []>} : vector<16x384xf32>, vector<384x128xf32>, vector<16x128xf32> -> vector<16x128xf32>
    %96 = vector.broadcast %84 : vector<1x128xf32> to vector<16x128xf32>
    %97 = arith.addf %95, %96 : vector<16x128xf32>
    %c0_63 = arith.constant 0 : index
    %c0_64 = arith.constant 0 : index
    %98 = vector.load %arg11[%c0_63, %c0_64] : memref<16x128xf32, #tpu.memory_space<vmem>>, vector<16x128xf32>
    tpu.vector_store %arg11[%c0_63, %c0_64], %97 {strides = array<i32>} : memref<16x128xf32, #tpu.memory_space<vmem>>, vector<16x128xf32>,
    return
  }
  func.func @transform_0(%arg0: i32) -> (i32, i32) {
    %c0_i32 = arith.constant 0 : i32
    %c0_i32_0 = arith.constant 0 : i32
    %c0_i32_1 = arith.constant 0 : i32
    return %c0_i32, %c0_i32_0 : i32, i32
  }
  func.func @transform_1(%arg0: i32) -> (i32, i32) {
    %c0_i32 = arith.constant 0 : i32
    %c0_i32_0 = arith.constant 0 : i32
    %c0_i32_1 = arith.constant 0 : i32
    return %c0_i32, %c0_i32_0 : i32, i32
  }
  func.func @transform_2(%arg0: i32) -> (i32, i32) {
    %c0_i32 = arith.constant 0 : i32
    %c0_i32_0 = arith.constant 0 : i32
    %c0_i32_1 = arith.constant 0 : i32
    return %c0_i32, %c0_i32_0 : i32, i32
  }
  func.func @transform_3(%arg0: i32) -> (i32, i32) {
    %c0_i32 = arith.constant 0 : i32
    %c0_i32_0 = arith.constant 0 : i32
    %c0_i32_1 = arith.constant 0 : i32
    return %c0_i32, %c0_i32_0 : i32, i32
  }
  func.func @transform_4(%arg0: i32) -> (i32, i32) {
    %c0_i32 = arith.constant 0 : i32
    %c0_i32_0 = arith.constant 0 : i32
    %c0_i32_1 = arith.constant 0 : i32
    return %c0_i32, %c0_i32_0 : i32, i32
  }
  func.func @transform_5(%arg0: i32) -> (i32, i32) {
    %c0_i32 = arith.constant 0 : i32
    %c0_i32_0 = arith.constant 0 : i32
    %c0_i32_1 = arith.constant 0 : i32
    return %c0_i32, %c0_i32_0 : i32, i32
  }
  func.func @transform_6(%arg0: i32) -> (i32, i32) {
    %c0_i32 = arith.constant 0 : i32
    %c0_i32_0 = arith.constant 0 : i32
    %c0_i32_1 = arith.constant 0 : i32
    return %c0_i32, %c0_i32_0 : i32, i32
  }
  func.func @transform_7(%arg0: i32) -> (i32, i32) {
    %c0_i32 = arith.constant 0 : i32
    %c0_i32_0 = arith.constant 0 : i32
    %c0_i32_1 = arith.constant 0 : i32
    return %c0_i32, %c0_i32_0 : i32, i32
  }
  func.func @transform_8(%arg0: i32) -> (i32, i32) {
    %c0_i32 = arith.constant 0 : i32
    %c0_i32_0 = arith.constant 0 : i32
    %c0_i32_1 = arith.constant 0 : i32
    return %c0_i32, %c0_i32_0 : i32, i32
  }
  func.func @transform_9(%arg0: i32) -> (i32, i32) {
    %c0_i32 = arith.constant 0 : i32
    %c0_i32_0 = arith.constant 0 : i32
    %c0_i32_1 = arith.constant 0 : i32
    return %c0_i32, %c0_i32_0 : i32, i32
  }
  func.func @transform_10(%arg0: i32) -> (i32, i32) {
    %c0_i32 = arith.constant 0 : i32
    %c0_i32_0 = arith.constant 0 : i32
    %c0_i32_1 = arith.constant 0 : i32
    return %c0_i32, %c0_i32_0 : i32, i32
  }
}

</mosaic_0001>

<llo_original>
// kernel: resblock2d_forward.1
$region0: #{resblock2d_forward.1}
  #allocation0 [shape = 'u32[]', space=smem, size = 0x4, offset = 0x4, fixed_abs, tag = 'smem constant byte address 0x4 - core index']
  #allocation1 [shape = 'u32[144,128]{1,0:T(1,128)}', space=vmem, size = 0x12000, scoped, tag = 'internal scratch']
  #allocation2 [shape = 'f32[2,17,128]{2,1,0:T(8,128)}', space=vmem, size = 0x6000, scoped, tag = 'scratch operand']
  %s0 = inlined_call_operand.vmem [shape: f32[16,128], index: 0, kind: input, shape index: {}]
  %s1 = inlined_call_operand.vmem [shape: f32[384,128], index: 1, kind: input, shape index: {}]
  %s2 = inlined_call_operand.vmem [shape: f32[384,128], index: 2, kind: input, shape index: {}]
  %s3 = inlined_call_operand.vmem [shape: f32[1,4], index: 3, kind: input, shape index: {}]
  %s4 = inlined_call_operand.vmem [shape: f32[1,4], index: 4, kind: input, shape index: {}]
  %s5 = inlined_call_operand.vmem [shape: f32[1,4], index: 5, kind: input, shape index: {}]
  %s6 = inlined_call_operand.vmem [shape: f32[1,4], index: 6, kind: input, shape index: {}]
  %s7 = inlined_call_operand.vmem [shape: f32[1,4], index: 7, kind: input, shape index: {}]
  %s8 = inlined_call_operand.vmem [shape: f32[128,4], index: 8, kind: input, shape index: {}]
  %s9 = inlined_call_operand.vmem [shape: f32[4,128], index: 9, kind: input, shape index: {}]
  %s10 = inlined_call_operand.vmem [shape: f32[16,128], index: 10, kind: output, shape index: {}]
  %s11 = sld [smem:[#allocation0]]
  $region50: #{resblock2d_forward.1} parent=0
    _
  %s13 = ssub.s32 1, %s11
  %s14 = scalar_select 0, %s13, %s11
  // Predicated region
  $region2: #{resblock2d_forward.1} parent=0 // pred_check
    _
  $region3: #{resblock2d_forward.1} parent=0 // pred_check_branch
    %16 = sbr.rel (0) target = $region5
  $region4: #{resblock2d_forward.1} parent=0 // pred_region
    _
  $region5: #{resblock2d_forward.1} parent=0 // pred_fallthru
    _
  // Predicated region
  $region6: #{resblock2d_forward.1} parent=0 // pred_check
    _
  $region7: #{resblock2d_forward.1} parent=0 // pred_check_branch
    %18 = sbr.rel (0) target = $region9
  $region8: #{resblock2d_forward.1} parent=0 // pred_region
    _
  $region9: #{resblock2d_forward.1} parent=0 // pred_fallthru
    _
  // Predicated region
  $region10: #{resblock2d_forward.1} parent=0 // pred_check
    _
  $region11: #{resblock2d_forward.1} parent=0 // pred_check_branch
    %20 = sbr.rel (0) target = $region13
  $region12: #{resblock2d_forward.1} parent=0 // pred_region
    _
  $region13: #{resblock2d_forward.1} parent=0 // pred_fallthru
    _
  // Predicated region
  $region14: #{resblock2d_forward.1} parent=0 // pred_check
    _
  $region15: #{resblock2d_forward.1} parent=0 // pred_check_branch
    %22 = sbr.rel (0) target = $region17
  $region16: #{resblock2d_forward.1} parent=0 // pred_region
    _
  $region17: #{resblock2d_forward.1} parent=0 // pred_fallthru
    _
  // Predicated region
  $region18: #{resblock2d_forward.1} parent=0 // pred_check
    _
  $region19: #{resblock2d_forward.1} parent=0 // pred_check_branch
    %24 = sbr.rel (0) target = $region21
  $region20: #{resblock2d_forward.1} parent=0 // pred_region
    _
  $region21: #{resblock2d_forward.1} parent=0 // pred_fallthru
    _
  // Predicated region
  $region22: #{resblock2d_forward.1} parent=0 // pred_check
    _
  $region23: #{resblock2d_forward.1} parent=0 // pred_check_branch
    %26 = sbr.rel (0) target = $region25
  $region24: #{resblock2d_forward.1} parent=0 // pred_region
    _
  $region25: #{resblock2d_forward.1} parent=0 // pred_fallthru
    _
  // Predicated region
  $region26: #{resblock2d_forward.1} parent=0 // pred_check
    _
  $region27: #{resblock2d_forward.1} parent=0 // pred_check_branch
    %28 = sbr.rel (0) target = $region29
  $region28: #{resblock2d_forward.1} parent=0 // pred_region
    _
  $region29: #{resblock2d_forward.1} parent=0 // pred_fallthru
    _
  // Predicated region
  $region30: #{resblock2d_forward.1} parent=0 // pred_check
    _
  $region31: #{resblock2d_forward.1} parent=0 // pred_check_branch
    %30 = sbr.rel (0) target = $region33
  $region32: #{resblock2d_forward.1} parent=0 // pred_region
    _
  $region33: #{resblock2d_forward.1} parent=0 // pred_fallthru
    _
  // Predicated region
  $region34: #{resblock2d_forward.1} parent=0 // pred_check
    _
  $region35: #{resblock2d_forward.1} parent=0 // pred_check_branch
    %32 = sbr.rel (0) target = $region37
  $region36: #{resblock2d_forward.1} parent=0 // pred_region
    _
  $region37: #{resblock2d_forward.1} parent=0 // pred_fallthru
    _
  // Predicated region
  $region38: #{resblock2d_forward.1} parent=0 // pred_check
    _
  $region39: #{resblock2d_forward.1} parent=0 // pred_check_branch
    %34 = sbr.rel (0) target = $region41
  $region40: #{resblock2d_forward.1} parent=0 // pred_region
    _
  $region41: #{resblock2d_forward.1} parent=0 // pred_fallthru
    _
  %v35 = vld [vmem:[%s8] sm:$0xff]
  %v36 = vld [vmem:[%s8 + $0x8] sm:$0xff]
  %v37 = vld [vmem:[%s8 + $0x10] sm:$0xff]
  %v38 = vld [vmem:[%s8 + $0x18] sm:$0xff]
  %v39 = vld [vmem:[%s8 + $0x20] sm:$0xff]
  %v40 = vld [vmem:[%s8 + $0x28] sm:$0xff]
  %v41 = vld [vmem:[%s8 + $0x30] sm:$0xff]
  %v42 = vld [vmem:[%s8 + $0x38] sm:$0xff]
  %v43 = vld [vmem:[%s8 + $0x40] sm:$0xff]
  %v44 = vld [vmem:[%s8 + $0x48] sm:$0xff]
  %v45 = vld [vmem:[%s8 + $0x50] sm:$0xff]
  %v46 = vld [vmem:[%s8 + $0x58] sm:$0xff]
  %v47 = vld [vmem:[%s8 + $0x60] sm:$0xff]
  %v48 = vld [vmem:[%s8 + $0x68] sm:$0xff]
  %v49 = vld [vmem:[%s8 + $0x70] sm:$0xff]
  %v50 = vld [vmem:[%s8 + $0x78] sm:$0xff]
  %v51 = vld [vmem:[%s9] sm:$0xf]
  %52 = vst [vmem:[#allocation2 + $0x7] sm:$0x1] 0.0
  %53 = vst [vmem:[#allocation2 + $0x1f] sm:$0x1] 0.0
  %54 = vst [vmem:[#allocation2 + $0x10] sm:$0x1] 0.0
  %55 = vst [vmem:[#allocation2 + $0x28] sm:$0x1] 0.0
  %v56 = vld [vmem:[%s0] sm:$0xff]
  %v57 = vld [vmem:[%s0 + $0x8] sm:$0xff]
  %v58 = vld [vmem:[%s4] sm:$0x1]
  %v59 = vld [vmem:[%s5] sm:$0x1]
  %v60 = vmul.f32 %v56, %v56
  %v61 = vmul.f32 %v57, %v57
  %62 = vmatprep.subr.mxu0 0.0
  %63 = vmatpush1.msra.mxu0 %v50
  %64 = vmatprep.subr.mxu0 0.0
  %65 = vmatpush1.msra.mxu0 %v49
  %66 = vmatprep.subr.mxu0 0.0
  %67 = vmatpush1.msra.mxu0 %v48
  %68 = vmatprep.subr.mxu0 0.0
  %69 = vmatpush1.msra.mxu0 %v47
  %70 = vmatprep.subr.mxu0 0.0
  %71 = vmatpush1.msra.mxu0 %v46
  %72 = vmatprep.subr.mxu0 0.0
  %73 = vmatpush1.msra.mxu0 %v45
  %74 = vmatprep.subr.mxu0 0.0
  %75 = vmatpush1.msra.mxu0 %v44
  %76 = vmatprep.subr.mxu0 0.0
  %77 = vmatpush1.msra.mxu0 %v43
  %78 = vmatprep.subr.mxu0 0.0
  %79 = vmatpush1.msra.mxu0 %v42
  %80 = vmatprep.subr.mxu0 0.0
  %81 = vmatpush1.msra.mxu0 %v41
  %82 = vmatprep.subr.mxu0 0.0
  %83 = vmatpush1.msra.mxu0 %v40
  %84 = vmatprep.subr.mxu0 0.0
  %85 = vmatpush1.msra.mxu0 %v39
  %86 = vmatprep.subr.mxu0 0.0
  %87 = vmatpush1.msra.mxu0 %v38
  %88 = vmatprep.subr.mxu0 0.0
  %89 = vmatpush1.msra.mxu0 %v37
  %90 = vmatprep.subr.mxu0 0.0
  %91 = vmatpush1.msra.mxu0 %v36
  %92 = vmatprep.subr.mxu0 0.0
  %93 = vmatpush1.msra.mxu0 %v35
  %94 = vmatprep.subr.mxu0 0.0
  %95 = vmatpush2.msra.mxu0 0.0
  %96 = vmatprep.subr.mxu0 0.0
  %97 = vmatpush2.msra.mxu0 0.0
  %98 = vmatprep.subr.mxu0 0.0
  %99 = vmatpush2.msra.mxu0 0.0
  %100 = vmatprep.subr.mxu0 0.0
  %101 = vmatpush2.msra.mxu0 0.0
  %102 = vmatprep.subr.mxu0 0.0
  %103 = vmatpush2.msra.mxu0 0.0
  %104 = vmatprep.subr.mxu0 0.0
  %105 = vmatpush2.msra.mxu0 0.0
  %106 = vmatprep.subr.mxu0 0.0
  %107 = vmatpush2.msra.mxu0 0.0
  %108 = vmatprep.subr.mxu0 0.0
  %109 = vmatpush2.msra.mxu0 0.0
  %110 = vmatprep.subr.mxu0 0.0
  %111 = vmatpush2.msra.mxu0 0.0
  %112 = vmatprep.subr.mxu0 0.0
  %113 = vmatpush2.msra.mxu0 0.0
  %114 = vmatprep.subr.mxu0 0.0
  %115 = vmatpush2.msra.mxu0 0.0
  %116 = vmatprep.subr.mxu0 0.0
  %117 = vmatpush2.msra.mxu0 0.0
  %118 = vmatprep.subr.mxu0 0.0
  %119 = vmatpush2.msra.mxu0 0.0
  %120 = vmatprep.subr.mxu0 0.0
  %121 = vmatpush2.msra.mxu0 0.0
  %122 = vmatprep.subr.mxu0 0.0
  %123 = vmatpush2.msra.mxu0 0.0
  %124 = vmatprep.subr.mxu0 0.0
  %125 = vmatpush2.msra.mxu0 0.0
  %126 = vmatprep.mubr.f32.mxu0 0.0
  %127 = vmatmul.mubr.f32.gmra.mxu0 %v56
  %v128 = vpop.f32.mrf.mxu0
  %v129 = vadd.f32 0.0, %v128
  %v130 = vpop.f32.mrf.mxu0
  %131 = vmatprep.mubr.f32.mxu0 0.0
  %132 = vmatmul.mubr.f32.gmra.mxu0 %v57
  %v133 = vpop.f32.mrf.mxu0
  %v134 = vadd.f32 0.0, %v133
  %v135 = vpop.f32.mrf.mxu0
  %136 = vmatprep.mubr.f32.mxu0 0.0
  %137 = vmatmul.mubr.f32.gmra.mxu0 %v60
  %v138 = vpop.f32.mrf.mxu0
  %v139 = vadd.f32 0.0, %v138
  %v140 = vpop.f32.mrf.mxu0
  %141 = vmatprep.mubr.f32.mxu0 0.0
  %142 = vmatmul.mubr.f32.gmra.mxu0 %v61
  %v143 = vpop.f32.mrf.mxu0
  %v144 = vadd.f32 0.0, %v143
  %v145 = vpop.f32.mrf.mxu0
  %146 = vdwg.mxu0
  %vm147 = vcmask 31744
  %v148 = vsel %vm147, %v129, 0.0
  %v149 = vsel %vm147, %v134, 0.0
  %v150 = vadd.f32 %v148, %v149
  %v151 = vrot.slane %v150, 4
  %v152 = vadd.f32 %v150, %v151
  %v153 = vrot.slane %v152, 2
  %v154 = vadd.f32 %v152, %v153
  %v155 = vrot.slane %v154, 1
  %v156 = vadd.f32 %v154, %v155
  %v157 = vsel %vm147, %v139, 0.0
  %v158 = vsel %vm147, %v144, 0.0
  %v159 = vadd.f32 %v157, %v158
  %v160 = vrot.slane %v159, 4
  %v161 = vadd.f32 %v159, %v160
  %v162 = vrot.slane %v161, 2
  %v163 = vadd.f32 %v161, %v162
  %v164 = vrot.slane %v163, 1
  %v165 = vadd.f32 %v163, %v164
  %v166 = vmul.f32 %v156, 0.001953125
  %v167 = vmul.f32 %v165, 0.001953125
  %v168 = vmul.f32 %v166, %v166
  %v169 = vsub.f32 %v167, %v168
  %v170 = vadd.f32 %v169, 1e-05
  %v171 = vrsqrt.pop %v170
  %v172 = vmul.f32 %v58, %v171
  %v173 = vmul.f32 %v166, %v172
  %v174 = vsub.f32 %v59, %v173
  %v176 = vlaneseq
  %v177 = vshrl.u32 %v176, 7
  %v178 = vsub.s32 0, %v177
  %v179 = vrot.slane %v174, %v178
  %vm181 = vcmask 1040384
  %v182 = vsel %vm181, %v172, %v179
  %v184 = vsel %vm147, %v182, 0
  %vm186 = vcmask 1043456
  %v188 = vsel %vm186, %v51, 0
  %190 = vmatprep.subr.mxu0 0.0
  %191 = vmatpush1.msra.mxu0 0.0
  %192 = vmatprep.subr.mxu0 0.0
  %193 = vmatpush1.msra.mxu0 0.0
  %194 = vmatprep.subr.mxu0 0.0
  %195 = vmatpush1.msra.mxu0 0.0
  %196 = vmatprep.subr.mxu0 0.0
  %197 = vmatpush1.msra.mxu0 0.0
  %198 = vmatprep.subr.mxu0 0.0
  %199 = vmatpush1.msra.mxu0 0.0
  %200 = vmatprep.subr.mxu0 0.0
  %201 = vmatpush1.msra.mxu0 0.0
  %202 = vmatprep.subr.mxu0 0.0
  %203 = vmatpush1.msra.mxu0 0.0
  %204 = vmatprep.subr.mxu0 0.0
  %205 = vmatpush1.msra.mxu0 0.0
  %206 = vmatprep.subr.mxu0 0.0
  %207 = vmatpush1.msra.mxu0 0.0
  %208 = vmatprep.subr.mxu0 0.0
  %209 = vmatpush1.msra.mxu0 0.0
  %210 = vmatprep.subr.mxu0 0.0
  %211 = vmatpush1.msra.mxu0 0.0
  %212 = vmatprep.subr.mxu0 0.0
  %213 = vmatpush1.msra.mxu0 0.0
  %214 = vmatprep.subr.mxu0 0.0
  %215 = vmatpush1.msra.mxu0 0.0
  %216 = vmatprep.subr.mxu0 0.0
  %217 = vmatpush1.msra.mxu0 0.0
  %218 = vmatprep.subr.mxu0 0.0
  %219 = vmatpush1.msra.mxu0 0.0
  %220 = vmatprep.subr.mxu0 0.0
  %221 = vmatpush1.msra.mxu0 %v188
  %222 = vmatprep.subr.mxu0 0.0
  %223 = vmatpush2.msra.mxu0 0.0
  %224 = vmatprep.subr.mxu0 0.0
  %225 = vmatpush2.msra.mxu0 0.0
  %226 = vmatprep.subr.mxu0 0.0
  %227 = vmatpush2.msra.mxu0 0.0
  %228 = vmatprep.subr.mxu0 0.0
  %229 = vmatpush2.msra.mxu0 0.0
  %230 = vmatprep.subr.mxu0 0.0
  %231 = vmatpush2.msra.mxu0 0.0
  %232 = vmatprep.subr.mxu0 0.0
  %233 = vmatpush2.msra.mxu0 0.0
  %234 = vmatprep.subr.mxu0 0.0
  %235 = vmatpush2.msra.mxu0 0.0
  %236 = vmatprep.subr.mxu0 0.0
  %237 = vmatpush2.msra.mxu0 0.0
  %238 = vmatprep.subr.mxu0 0.0
  %239 = vmatpush2.msra.mxu0 0.0
  %240 = vmatprep.subr.mxu0 0.0
  %241 = vmatpush2.msra.mxu0 0.0
  %242 = vmatprep.subr.mxu0 0.0
  %243 = vmatpush2.msra.mxu0 0.0
  %244 = vmatprep.subr.mxu0 0.0
  %245 = vmatpush2.msra.mxu0 0.0
  %246 = vmatprep.subr.mxu0 0.0
  %247 = vmatpush2.msra.mxu0 0.0
  %248 = vmatprep.subr.mxu0 0.0
  %249 = vmatpush2.msra.mxu0 0.0
  %250 = vmatprep.subr.mxu0 0.0
  %251 = vmatpush2.msra.mxu0 0.0
  %252 = vmatprep.subr.mxu0 0.0
  %253 = vmatpush2.msra.mxu0 0.0
  %254 = vmatprep.mubr.f32.mxu0 0.0
  %255 = vmatmul.mubr.f32.gmra.mxu0 %v184
  %v256 = vpop.f32.mrf.mxu0
  %v257 = vadd.f32 0.0, %v256
  %v258 = vpop.f32.mrf.mxu0
  %259 = vdwg.mxu0
  %v260 = vlaneseq
  %v261 = vshrl.u32 %v260, 7
  %v262 = vsub.s32 0, %v261
  %v263 = vrot.slane %v257, %v262
  %v264 = vmul.f32 %v56, %v263
  %v265 = vmul.f32 %v57, %v263
  %v266 = vlaneseq
  %v267 = vshrl.u32 %v266, 7
  %v268 = vsub.s32 1, %v267
  %v269 = vrot.slane %v257, %v268
  %v270 = vadd.f32 %v264, %v269
  %v271 = vadd.f32 %v265, %v269
  %v272 = vmax.f32 %v270, 0.0
  %v273 = vmax.f32 %v271, 0.0
  %274 = vst [vmem:[#allocation2 + $0x8] sm:$0xff] %v272
  %275 = vst [vmem:[#allocation2 + $0x20] sm:$0xff] %v273
  %v276 = vld [vmem:[#allocation2 + $0x7] sm:$0xff]
  %v277 = vld [vmem:[#allocation2 + $0x1f] sm:$0xff]
  %v278 = vld [vmem:[#allocation2 + $0x8] sm:$0xff]
  %v279 = vld [vmem:[#allocation2 + $0x20] sm:$0xff]
  %v280 = vld [vmem:[#allocation2 + $0x9] sm:$0xff]
  %v281 = vld [vmem:[#allocation2 + $0x21] sm:$0xff]
  %v282 = vld [vmem:[%s1] sm:$0xff]
  %v283 = vld [vmem:[%s1 + $0x8] sm:$0xff]
  %v284 = vld [vmem:[%s1 + $0x10] sm:$0xff]
  %v285 = vld [vmem:[%s1 + $0x18] sm:$0xff]
  %v286 = vld [vmem:[%s1 + $0x20] sm:$0xff]
  %v287 = vld [vmem:[%s1 + $0x28] sm:$0xff]
  %v288 = vld [vmem:[%s1 + $0x30] sm:$0xff]
  %v289 = vld [vmem:[%s1 + $0x38] sm:$0xff]
  %v290 = vld [vmem:[%s1 + $0x40] sm:$0xff]
  %v291 = vld [vmem:[%s1 + $0x48] sm:$0xff]
  %v292 = vld [vmem:[%s1 + $0x50] sm:$0xff]
  %v293 = vld [vmem:[%s1 + $0x58] sm:$0xff]
  %v294 = vld [vmem:[%s1 + $0x60] sm:$0xff]
  %v295 = vld [vmem:[%s1 + $0x68] sm:$0xff]
  %v296 = vld [vmem:[%s1 + $0x70] sm:$0xff]
  %v297 = vld [vmem:[%s1 + $0x78] sm:$0xff]
  %v298 = vld [vmem:[%s1 + $0x80] sm:$0xff]
  %v299 = vld [vmem:[%s1 + $0x88] sm:$0xff]
  %v300 = vld [vmem:[%s1 + $0x90] sm:$0xff]
  %v301 = vld [vmem:[%s1 + $0x98] sm:$0xff]
  %v302 = vld [vmem:[%s1 + $0xa0] sm:$0xff]
  %v303 = vld [vmem:[%s1 + $0xa8] sm:$0xff]
  %v304 = vld [vmem:[%s1 + $0xb0] sm:$0xff]
  %v305 = vld [vmem:[%s1 + $0xb8] sm:$0xff]
  %v306 = vld [vmem:[%s1 + $0xc0] sm:$0xff]
  %v307 = vld [vmem:[%s1 + $0xc8] sm:$0xff]
  %v308 = vld [vmem:[%s1 + $0xd0] sm:$0xff]
  %v309 = vld [vmem:[%s1 + $0xd8] sm:$0xff]
  %v310 = vld [vmem:[%s1 + $0xe0] sm:$0xff]
  %v311 = vld [vmem:[%s1 + $0xe8] sm:$0xff]
  %v312 = vld [vmem:[%s1 + $0xf0] sm:$0xff]
  %v313 = vld [vmem:[%s1 + $0xf8] sm:$0xff]
  %v314 = vld [vmem:[%s1 + $0x100] sm:$0xff]
  %v315 = vld [vmem:[%s1 + $0x108] sm:$0xff]
  %v316 = vld [vmem:[%s1 + $0x110] sm:$0xff]
  %v317 = vld [vmem:[%s1 + $0x118] sm:$0xff]
  %v318 = vld [vmem:[%s1 + $0x120] sm:$0xff]
  %v319 = vld [vmem:[%s1 + $0x128] sm:$0xff]
  %v320 = vld [vmem:[%s1 + $0x130] sm:$0xff]
  %v321 = vld [vmem:[%s1 + $0x138] sm:$0xff]
  %v322 = vld [vmem:[%s1 + $0x140] sm:$0xff]
  %v323 = vld [vmem:[%s1 + $0x148] sm:$0xff]
  %v324 = vld [vmem:[%s1 + $0x150] sm:$0xff]
  %v325 = vld [vmem:[%s1 + $0x158] sm:$0xff]
  %v326 = vld [vmem:[%s1 + $0x160] sm:$0xff]
  %v327 = vld [vmem:[%s1 + $0x168] sm:$0xff]
  %v328 = vld [vmem:[%s1 + $0x170] sm:$0xff]
  %v329 = vld [vmem:[%s1 + $0x178] sm:$0xff]
  %330 = vmatprep.subr.mxu0 0.0
  %331 = vmatpush1.msra.mxu0 %v297
  %332 = vmatprep.subr.mxu0 0.0
  %333 = vmatpush1.msra.mxu0 %v296
  %334 = vmatprep.subr.mxu0 0.0
  %335 = vmatpush1.msra.mxu0 %v295
  %336 = vmatprep.subr.mxu0 0.0
  %337 = vmatpush1.msra.mxu0 %v294
  %338 = vmatprep.subr.mxu0 0.0
  %339 = vmatpush1.msra.mxu0 %v293
  %340 = vmatprep.subr.mxu0 0.0
  %341 = vmatpush1.msra.mxu0 %v292
  %342 = vmatprep.subr.mxu0 0.0
  %343 = vmatpush1.msra.mxu0 %v291
  %344 = vmatprep.subr.mxu0 0.0
  %345 = vmatpush1.msra.mxu0 %v290
  %346 = vmatprep.subr.mxu0 0.0
  %347 = vmatpush1.msra.mxu0 %v289
  %348 = vmatprep.subr.mxu0 0.0
  %349 = vmatpush1.msra.mxu0 %v288
  %350 = vmatprep.subr.mxu0 0.0
  %351 = vmatpush1.msra.mxu0 %v287
  %352 = vmatprep.subr.mxu0 0.0
  %353 = vmatpush1.msra.mxu0 %v286
  %354 = vmatprep.subr.mxu0 0.0
  %355 = vmatpush1.msra.mxu0 %v285
  %356 = vmatprep.subr.mxu0 0.0
  %357 = vmatpush1.msra.mxu0 %v284
  %358 = vmatprep.subr.mxu0 0.0
  %359 = vmatpush1.msra.mxu0 %v283
  %360 = vmatprep.subr.mxu0 0.0
  %361 = vmatpush1.msra.mxu0 %v282
  %362 = vmatprep.subr.mxu0 0.0
  %363 = vmatpush2.msra.mxu0 %v313
  %364 = vmatprep.subr.mxu0 0.0
  %365 = vmatpush2.msra.mxu0 %v312
  %366 = vmatprep.subr.mxu0 0.0
  %367 = vmatpush2.msra.mxu0 %v311
  %368 = vmatprep.subr.mxu0 0.0
  %369 = vmatpush2.msra.mxu0 %v310
  %370 = vmatprep.subr.mxu0 0.0
  %371 = vmatpush2.msra.mxu0 %v309
  %372 = vmatprep.subr.mxu0 0.0
  %373 = vmatpush2.msra.mxu0 %v308
  %374 = vmatprep.subr.mxu0 0.0
  %375 = vmatpush2.msra.mxu0 %v307
  %376 = vmatprep.subr.mxu0 0.0
  %377 = vmatpush2.msra.mxu0 %v306
  %378 = vmatprep.subr.mxu0 0.0
  %379 = vmatpush2.msra.mxu0 %v305
  %380 = vmatprep.subr.mxu0 0.0
  %381 = vmatpush2.msra.mxu0 %v304
  %382 = vmatprep.subr.mxu0 0.0
  %383 = vmatpush2.msra.mxu0 %v303
  %384 = vmatprep.subr.mxu0 0.0
  %385 = vmatpush2.msra.mxu0 %v302
  %386 = vmatprep.subr.mxu0 0.0
  %387 = vmatpush2.msra.mxu0 %v301
  %388 = vmatprep.subr.mxu0 0.0
  %389 = vmatpush2.msra.mxu0 %v300
  %390 = vmatprep.subr.mxu0 0.0
  %391 = vmatpush2.msra.mxu0 %v299
  %392 = vmatprep.subr.mxu0 0.0
  %393 = vmatpush2.msra.mxu0 %v298
  %394 = vmatprep.mubr.f32.mxu0 %v278
  %395 = vmatmul.mubr.f32.gmra.mxu0 %v276
  %v396 = vpop.f32.mrf.mxu0
  %v397 = vadd.f32 0.0, %v396
  %v398 = vpop.f32.mrf.mxu0
  %399 = vmatprep.mubr.f32.mxu0 %v279
  %400 = vmatmul.mubr.f32.gmra.mxu0 %v277
  %v401 = vpop.f32.mrf.mxu0
  %v402 = vadd.f32 0.0, %v401
  %v403 = vpop.f32.mrf.mxu0
  %404 = vdwg.mxu0
  %405 = vmatprep.subr.mxu0 0.0
  %406 = vmatpush1.msra.mxu0 %v329
  %407 = vmatprep.subr.mxu0 0.0
  %408 = vmatpush1.msra.mxu0 %v328
  %409 = vmatprep.subr.mxu0 0.0
  %410 = vmatpush1.msra.mxu0 %v327
  %411 = vmatprep.subr.mxu0 0.0
  %412 = vmatpush1.msra.mxu0 %v326
  %413 = vmatprep.subr.mxu0 0.0
  %414 = vmatpush1.msra.mxu0 %v325
  %415 = vmatprep.subr.mxu0 0.0
  %416 = vmatpush1.msra.mxu0 %v324
  %417 = vmatprep.subr.mxu0 0.0
  %418 = vmatpush1.msra.mxu0 %v323
  %419 = vmatprep.subr.mxu0 0.0
  %420 = vmatpush1.msra.mxu0 %v322
  %421 = vmatprep.subr.mxu0 0.0
  %422 = vmatpush1.msra.mxu0 %v321
  %423 = vmatprep.subr.mxu0 0.0
  %424 = vmatpush1.msra.mxu0 %v320
  %425 = vmatprep.subr.mxu0 0.0
  %426 = vmatpush1.msra.mxu0 %v319
  %427 = vmatprep.subr.mxu0 0.0
  %428 = vmatpush1.msra.mxu0 %v318
  %429 = vmatprep.subr.mxu0 0.0
  %430 = vmatpush1.msra.mxu0 %v317
  %431 = vmatprep.subr.mxu0 0.0
  %432 = vmatpush1.msra.mxu0 %v316
  %433 = vmatprep.subr.mxu0 0.0
  %434 = vmatpush1.msra.mxu0 %v315
  %435 = vmatprep.subr.mxu0 0.0
  %436 = vmatpush1.msra.mxu0 %v314
  %437 = vmatprep.subr.mxu0 0.0
  %438 = vmatpush2.msra.mxu0 0.0
  %439 = vmatprep.subr.mxu0 0.0
  %440 = vmatpush2.msra.mxu0 0.0
  %441 = vmatprep.subr.mxu0 0.0
  %442 = vmatpush2.msra.mxu0 0.0
  %443 = vmatprep.subr.mxu0 0.0
  %444 = vmatpush2.msra.mxu0 0.0
  %445 = vmatprep.subr.mxu0 0.0
  %446 = vmatpush2.msra.mxu0 0.0
  %447 = vmatprep.subr.mxu0 0.0
  %448 = vmatpush2.msra.mxu0 0.0
  %449 = vmatprep.subr.mxu0 0.0
  %450 = vmatpush2.msra.mxu0 0.0
  %451 = vmatprep.subr.mxu0 0.0
  %452 = vmatpush2.msra.mxu0 0.0
  %453 = vmatprep.subr.mxu0 0.0
  %454 = vmatpush2.msra.mxu0 0.0
  %455 = vmatprep.subr.mxu0 0.0
  %456 = vmatpush2.msra.mxu0 0.0
  %457 = vmatprep.subr.mxu0 0.0
  %458 = vmatpush2.msra.mxu0 0.0
  %459 = vmatprep.subr.mxu0 0.0
  %460 = vmatpush2.msra.mxu0 0.0
  %461 = vmatprep.subr.mxu0 0.0
  %462 = vmatpush2.msra.mxu0 0.0
  %463 = vmatprep.subr.mxu0 0.0
  %464 = vmatpush2.msra.mxu0 0.0
  %465 = vmatprep.subr.mxu0 0.0
  %466 = vmatpush2.msra.mxu0 0.0
  %467 = vmatprep.subr.mxu0 0.0
  %468 = vmatpush2.msra.mxu0 0.0
  %469 = vmatprep.mubr.f32.mxu0 0.0
  %470 = vmatmul.mubr.f32.gmra.mxu0 %v280
  %v471 = vpop.f32.mrf.mxu0
  %v472 = vadd.f32 %v397, %v471
  %v473 = vpop.f32.mrf.mxu0
  %474 = vmatprep.mubr.f32.mxu0 0.0
  %475 = vmatmul.mubr.f32.gmra.mxu0 %v281
  %v476 = vpop.f32.mrf.mxu0
  %v477 = vadd.f32 %v402, %v476
  %v478 = vpop.f32.mrf.mxu0
  %479 = vdwg.mxu0
  %v480 = vld [vmem:[%s6] sm:$0x1]
  %v481 = vld [vmem:[%s7] sm:$0x1]
  %v482 = vld [vmem:[%s3] sm:$0x1]
  %v483 = vmul.f32 %v472, %v472
  %v484 = vmul.f32 %v477, %v477
  %485 = vmatprep.subr.mxu0 0.0
  %486 = vmatpush1.msra.mxu0 %v50
  %487 = vmatprep.subr.mxu0 0.0
  %488 = vmatpush1.msra.mxu0 %v49
  %489 = vmatprep.subr.mxu0 0.0
  %490 = vmatpush1.msra.mxu0 %v48
  %491 = vmatprep.subr.mxu0 0.0
  %492 = vmatpush1.msra.mxu0 %v47
  %493 = vmatprep.subr.mxu0 0.0
  %494 = vmatpush1.msra.mxu0 %v46
  %495 = vmatprep.subr.mxu0 0.0
  %496 = vmatpush1.msra.mxu0 %v45
  %497 = vmatprep.subr.mxu0 0.0
  %498 = vmatpush1.msra.mxu0 %v44
  %499 = vmatprep.subr.mxu0 0.0
  %500 = vmatpush1.msra.mxu0 %v43
  %501 = vmatprep.subr.mxu0 0.0
  %502 = vmatpush1.msra.mxu0 %v42
  %503 = vmatprep.subr.mxu0 0.0
  %504 = vmatpush1.msra.mxu0 %v41
  %505 = vmatprep.subr.mxu0 0.0
  %506 = vmatpush1.msra.mxu0 %v40
  %507 = vmatprep.subr.mxu0 0.0
  %508 = vmatpush1.msra.mxu0 %v39
  %509 = vmatprep.subr.mxu0 0.0
  %510 = vmatpush1.msra.mxu0 %v38
  %511 = vmatprep.subr.mxu0 0.0
  %512 = vmatpush1.msra.mxu0 %v37
  %513 = vmatprep.subr.mxu0 0.0
  %514 = vmatpush1.msra.mxu0 %v36
  %515 = vmatprep.subr.mxu0 0.0
  %516 = vmatpush1.msra.mxu0 %v35
  %517 = vmatprep.subr.mxu0 0.0
  %518 = vmatpush2.msra.mxu0 0.0
  %519 = vmatprep.subr.mxu0 0.0
  %520 = vmatpush2.msra.mxu0 0.0
  %521 = vmatprep.subr.mxu0 0.0
  %522 = vmatpush2.msra.mxu0 0.0
  %523 = vmatprep.subr.mxu0 0.0
  %524 = vmatpush2.msra.mxu0 0.0
  %525 = vmatprep.subr.mxu0 0.0
  %526 = vmatpush2.msra.mxu0 0.0
  %527 = vmatprep.subr.mxu0 0.0
  %528 = vmatpush2.msra.mxu0 0.0
  %529 = vmatprep.subr.mxu0 0.0
  %530 = vmatpush2.msra.mxu0 0.0
  %531 = vmatprep.subr.mxu0 0.0
  %532 = vmatpush2.msra.mxu0 0.0
  %533 = vmatprep.subr.mxu0 0.0
  %534 = vmatpush2.msra.mxu0 0.0
  %535 = vmatprep.subr.mxu0 0.0
  %536 = vmatpush2.msra.mxu0 0.0
  %537 = vmatprep.subr.mxu0 0.0
  %538 = vmatpush2.msra.mxu0 0.0
  %539 = vmatprep.subr.mxu0 0.0
  %540 = vmatpush2.msra.mxu0 0.0
  %541 = vmatprep.subr.mxu0 0.0
  %542 = vmatpush2.msra.mxu0 0.0
  %543 = vmatprep.subr.mxu0 0.0
  %544 = vmatpush2.msra.mxu0 0.0
  %545 = vmatprep.subr.mxu0 0.0
  %546 = vmatpush2.msra.mxu0 0.0
  %547 = vmatprep.subr.mxu0 0.0
  %548 = vmatpush2.msra.mxu0 0.0
  %549 = vmatprep.mubr.f32.mxu0 0.0
  %550 = vmatmul.mubr.f32.gmra.mxu0 %v472
  %v551 = vpop.f32.mrf.mxu0
  %v552 = vadd.f32 0.0, %v551
  %v553 = vpop.f32.mrf.mxu0
  %554 = vmatprep.mubr.f32.mxu0 0.0
  %555 = vmatmul.mubr.f32.gmra.mxu0 %v477
  %v556 = vpop.f32.mrf.mxu0
  %v557 = vadd.f32 0.0, %v556
  %v558 = vpop.f32.mrf.mxu0
  %559 = vmatprep.mubr.f32.mxu0 0.0
  %560 = vmatmul.mubr.f32.gmra.mxu0 %v483
  %v561 = vpop.f32.mrf.mxu0
  %v562 = vadd.f32 0.0, %v561
  %v563 = vpop.f32.mrf.mxu0
  %564 = vmatprep.mubr.f32.mxu0 0.0
  %565 = vmatmul.mubr.f32.gmra.mxu0 %v484
  %v566 = vpop.f32.mrf.mxu0
  %v567 = vadd.f32 0.0, %v566
  %v568 = vpop.f32.mrf.mxu0
  %569 = vdwg.mxu0
  %v570 = vsel %vm147, %v552, 0.0
  %v571 = vsel %vm147, %v557, 0.0
  %v572 = vadd.f32 %v570, %v571
  %v573 = vrot.slane %v572, 4
  %v574 = vadd.f32 %v572, %v573
  %v575 = vrot.slane %v574, 2
  %v576 = vadd.f32 %v574, %v575
  %v577 = vrot.slane %v576, 1
  %v578 = vadd.f32 %v576, %v577
  %v579 = vsel %vm147, %v562, 0.0
  %v580 = vsel %vm147, %v567, 0.0
  %v581 = vadd.f32 %v579, %v580
  %v582 = vrot.slane %v581, 4
  %v583 = vadd.f32 %v581, %v582
  %v584 = vrot.slane %v583, 2
  %v585 = vadd.f32 %v583, %v584
  %v586 = vrot.slane %v585, 1
  %v587 = vadd.f32 %v585, %v586
  %v588 = vmul.f32 %v578, 0.001953125
  %v589 = vmul.f32 %v587, 0.001953125
  %v590 = vmul.f32 %v588, %v588
  %v591 = vsub.f32 %v589, %v590
  %v592 = vadd.f32 %v591, 1e-05
  %v593 = vrsqrt.pop %v592
  %v594 = vmul.f32 %v480, %v593
  %v595 = vmul.f32 %v588, %v594
  %v596 = vsub.f32 %v481, %v595
  %v598 = vlaneseq
  %v599 = vshrl.u32 %v598, 7
  %v600 = vsub.s32 0, %v599
  %v601 = vrot.slane %v596, %v600
  %v604 = vlaneseq
  %v605 = vshrl.u32 %v604, 7
  %v606 = vsub.s32 0, %v605
  %v607 = vrot.slane %v482, %v606
  %v609 = vsel %vm181, %v594, %v601
  %vm610 = vcmask 1041408
  %v611 = vsel %vm610, %v609, %v607
  %v613 = vsel %vm147, %v611, 0
  %615 = vmatprep.subr.mxu0 0.0
  %616 = vmatpush1.msra.mxu0 0.0
  %617 = vmatprep.subr.mxu0 0.0
  %618 = vmatpush1.msra.mxu0 0.0
  %619 = vmatprep.subr.mxu0 0.0
  %620 = vmatpush1.msra.mxu0 0.0
  %621 = vmatprep.subr.mxu0 0.0
  %622 = vmatpush1.msra.mxu0 0.0
  %623 = vmatprep.subr.mxu0 0.0
  %624 = vmatpush1.msra.mxu0 0.0
  %625 = vmatprep.subr.mxu0 0.0
  %626 = vmatpush1.msra.mxu0 0.0
  %627 = vmatprep.subr.mxu0 0.0
  %628 = vmatpush1.msra.mxu0 0.0
  %629 = vmatprep.subr.mxu0 0.0
  %630 = vmatpush1.msra.mxu0 0.0
  %631 = vmatprep.subr.mxu0 0.0
  %632 = vmatpush1.msra.mxu0 0.0
  %633 = vmatprep.subr.mxu0 0.0
  %634 = vmatpush1.msra.mxu0 0.0
  %635 = vmatprep.subr.mxu0 0.0
  %636 = vmatpush1.msra.mxu0 0.0
  %637 = vmatprep.subr.mxu0 0.0
  %638 = vmatpush1.msra.mxu0 0.0
  %639 = vmatprep.subr.mxu0 0.0
  %640 = vmatpush1.msra.mxu0 0.0
  %641 = vmatprep.subr.mxu0 0.0
  %642 = vmatpush1.msra.mxu0 0.0
  %643 = vmatprep.subr.mxu0 0.0
  %644 = vmatpush1.msra.mxu0 0.0
  %645 = vmatprep.subr.mxu0 0.0
  %646 = vmatpush1.msra.mxu0 %v188
  %647 = vmatprep.subr.mxu0 0.0
  %648 = vmatpush2.msra.mxu0 0.0
  %649 = vmatprep.subr.mxu0 0.0
  %650 = vmatpush2.msra.mxu0 0.0
  %651 = vmatprep.subr.mxu0 0.0
  %652 = vmatpush2.msra.mxu0 0.0
  %653 = vmatprep.subr.mxu0 0.0
  %654 = vmatpush2.msra.mxu0 0.0
  %655 = vmatprep.subr.mxu0 0.0
  %656 = vmatpush2.msra.mxu0 0.0
  %657 = vmatprep.subr.mxu0 0.0
  %658 = vmatpush2.msra.mxu0 0.0
  %659 = vmatprep.subr.mxu0 0.0
  %660 = vmatpush2.msra.mxu0 0.0
  %661 = vmatprep.subr.mxu0 0.0
  %662 = vmatpush2.msra.mxu0 0.0
  %663 = vmatprep.subr.mxu0 0.0
  %664 = vmatpush2.msra.mxu0 0.0
  %665 = vmatprep.subr.mxu0 0.0
  %666 = vmatpush2.msra.mxu0 0.0
  %667 = vmatprep.subr.mxu0 0.0
  %668 = vmatpush2.msra.mxu0 0.0
  %669 = vmatprep.subr.mxu0 0.0
  %670 = vmatpush2.msra.mxu0 0.0
  %671 = vmatprep.subr.mxu0 0.0
  %672 = vmatpush2.msra.mxu0 0.0
  %673 = vmatprep.subr.mxu0 0.0
  %674 = vmatpush2.msra.mxu0 0.0
  %675 = vmatprep.subr.mxu0 0.0
  %676 = vmatpush2.msra.mxu0 0.0
  %677 = vmatprep.subr.mxu0 0.0
  %678 = vmatpush2.msra.mxu0 0.0
  %679 = vmatprep.mubr.f32.mxu0 0.0
  %680 = vmatmul.mubr.f32.gmra.mxu0 %v613
  %v681 = vpop.f32.mrf.mxu0
  %v682 = vadd.f32 0.0, %v681
  %v683 = vpop.f32.mrf.mxu0
  %684 = vdwg.mxu0
  %v685 = vlaneseq
  %v686 = vshrl.u32 %v685, 7
  %v687 = vsub.s32 0, %v686
  %v688 = vrot.slane %v682, %v687
  %v689 = vmul.f32 %v472, %v688
  %v690 = vmul.f32 %v477, %v688
  %v691 = vlaneseq
  %v692 = vshrl.u32 %v691, 7
  %v693 = vsub.s32 1, %v692
  %v694 = vrot.slane %v682, %v693
  %v695 = vadd.f32 %v689, %v694
  %v696 = vadd.f32 %v690, %v694
  %v697 = vmax.f32 %v695, 0.0
  %v698 = vmax.f32 %v696, 0.0
  %699 = vst [vmem:[#allocation2 + $0x8] sm:$0xff] %v697
  %700 = vst [vmem:[#allocation2 + $0x20] sm:$0xff] %v698
  %v701 = vld [vmem:[#allocation2 + $0x7] sm:$0xff]
  %v702 = vld [vmem:[#allocation2 + $0x1f] sm:$0xff]
  %v703 = vld [vmem:[#allocation2 + $0x8] sm:$0xff]
  %v704 = vld [vmem:[#allocation2 + $0x20] sm:$0xff]
  %v705 = vld [vmem:[#allocation2 + $0x9] sm:$0xff]
  %v706 = vld [vmem:[#allocation2 + $0x21] sm:$0xff]
  %v707 = vld [vmem:[%s2] sm:$0xff]
  %v708 = vld [vmem:[%s2 + $0x8] sm:$0xff]
  %v709 = vld [vmem:[%s2 + $0x10] sm:$0xff]
  %v710 = vld [vmem:[%s2 + $0x18] sm:$0xff]
  %v711 = vld [vmem:[%s2 + $0x20] sm:$0xff]
  %v712 = vld [vmem:[%s2 + $0x28] sm:$0xff]
  %v713 = vld [vmem:[%s2 + $0x30] sm:$0xff]
  %v714 = vld [vmem:[%s2 + $0x38] sm:$0xff]
  %v715 = vld [vmem:[%s2 + $0x40] sm:$0xff]
  %v716 = vld [vmem:[%s2 + $0x48] sm:$0xff]
  %v717 = vld [vmem:[%s2 + $0x50] sm:$0xff]
  %v718 = vld [vmem:[%s2 + $0x58] sm:$0xff]
  %v719 = vld [vmem:[%s2 + $0x60] sm:$0xff]
  %v720 = vld [vmem:[%s2 + $0x68] sm:$0xff]
  %v721 = vld [vmem:[%s2 + $0x70] sm:$0xff]
  %v722 = vld [vmem:[%s2 + $0x78] sm:$0xff]
  %v723 = vld [vmem:[%s2 + $0x80] sm:$0xff]
  %v724 = vld [vmem:[%s2 + $0x88] sm:$0xff]
  %v725 = vld [vmem:[%s2 + $0x90] sm:$0xff]
  %v726 = vld [vmem:[%s2 + $0x98] sm:$0xff]
  %v727 = vld [vmem:[%s2 + $0xa0] sm:$0xff]
  %v728 = vld [vmem:[%s2 + $0xa8] sm:$0xff]
  %v729 = vld [vmem:[%s2 + $0xb0] sm:$0xff]
  %v730 = vld [vmem:[%s2 + $0xb8] sm:$0xff]
  %v731 = vld [vmem:[%s2 + $0xc0] sm:$0xff]
  %v732 = vld [vmem:[%s2 + $0xc8] sm:$0xff]
  %v733 = vld [vmem:[%s2 + $0xd0] sm:$0xff]
  %v734 = vld [vmem:[%s2 + $0xd8] sm:$0xff]
  %v735 = vld [vmem:[%s2 + $0xe0] sm:$0xff]
  %v736 = vld [vmem:[%s2 + $0xe8] sm:$0xff]
  %v737 = vld [vmem:[%s2 + $0xf0] sm:$0xff]
  %v738 = vld [vmem:[%s2 + $0xf8] sm:$0xff]
  %v739 = vld [vmem:[%s2 + $0x100] sm:$0xff]
  %v740 = vld [vmem:[%s2 + $0x108] sm:$0xff]
  %v741 = vld [vmem:[%s2 + $0x110] sm:$0xff]
  %v742 = vld [vmem:[%s2 + $0x118] sm:$0xff]
  %v743 = vld [vmem:[%s2 + $0x120] sm:$0xff]
  %v744 = vld [vmem:[%s2 + $0x128] sm:$0xff]
  %v745 = vld [vmem:[%s2 + $0x130] sm:$0xff]
  %v746 = vld [vmem:[%s2 + $0x138] sm:$0xff]
  %v747 = vld [vmem:[%s2 + $0x140] sm:$0xff]
  %v748 = vld [vmem:[%s2 + $0x148] sm:$0xff]
  %v749 = vld [vmem:[%s2 + $0x150] sm:$0xff]
  %v750 = vld [vmem:[%s2 + $0x158] sm:$0xff]
  %v751 = vld [vmem:[%s2 + $0x160] sm:$0xff]
  %v752 = vld [vmem:[%s2 + $0x168] sm:$0xff]
  %v753 = vld [vmem:[%s2 + $0x170] sm:$0xff]
  %v754 = vld [vmem:[%s2 + $0x178] sm:$0xff]
  %v755 = vlaneseq
  %v756 = vshrl.u32 %v755, 7
  %v757 = vsub.s32 2, %v756
  %v758 = vrot.slane %v682, %v757
  %759 = vmatprep.subr.mxu0 0.0
  %760 = vmatpush1.msra.mxu0 %v722
  %761 = vmatprep.subr.mxu0 0.0
  %762 = vmatpush1.msra.mxu0 %v721
  %763 = vmatprep.subr.mxu0 0.0
  %764 = vmatpush1.msra.mxu0 %v720
  %765 = vmatprep.subr.mxu0 0.0
  %766 = vmatpush1.msra.mxu0 %v719
  %767 = vmatprep.subr.mxu0 0.0
  %768 = vmatpush1.msra.mxu0 %v718
  %769 = vmatprep.subr.mxu0 0.0
  %770 = vmatpush1.msra.mxu0 %v717
  %771 = vmatprep.subr.mxu0 0.0
  %772 = vmatpush1.msra.mxu0 %v716
  %773 = vmatprep.subr.mxu0 0.0
  %774 = vmatpush1.msra.mxu0 %v715
  %775 = vmatprep.subr.mxu0 0.0
  %776 = vmatpush1.msra.mxu0 %v714
  %777 = vmatprep.subr.mxu0 0.0
  %778 = vmatpush1.msra.mxu0 %v713
  %779 = vmatprep.subr.mxu0 0.0
  %780 = vmatpush1.msra.mxu0 %v712
  %781 = vmatprep.subr.mxu0 0.0
  %782 = vmatpush1.msra.mxu0 %v711
  %783 = vmatprep.subr.mxu0 0.0
  %784 = vmatpush1.msra.mxu0 %v710
  %785 = vmatprep.subr.mxu0 0.0
  %786 = vmatpush1.msra.mxu0 %v709
  %787 = vmatprep.subr.mxu0 0.0
  %788 = vmatpush1.msra.mxu0 %v708
  %789 = vmatprep.subr.mxu0 0.0
  %790 = vmatpush1.msra.mxu0 %v707
  %791 = vmatprep.subr.mxu0 0.0
  %792 = vmatpush2.msra.mxu0 %v738
  %793 = vmatprep.subr.mxu0 0.0
  %794 = vmatpush2.msra.mxu0 %v737
  %795 = vmatprep.subr.mxu0 0.0
  %796 = vmatpush2.msra.mxu0 %v736
  %797 = vmatprep.subr.mxu0 0.0
  %798 = vmatpush2.msra.mxu0 %v735
  %799 = vmatprep.subr.mxu0 0.0
  %800 = vmatpush2.msra.mxu0 %v734
  %801 = vmatprep.subr.mxu0 0.0
  %802 = vmatpush2.msra.mxu0 %v733
  %803 = vmatprep.subr.mxu0 0.0
  %804 = vmatpush2.msra.mxu0 %v732
  %805 = vmatprep.subr.mxu0 0.0
  %806 = vmatpush2.msra.mxu0 %v731
  %807 = vmatprep.subr.mxu0 0.0
  %808 = vmatpush2.msra.mxu0 %v730
  %809 = vmatprep.subr.mxu0 0.0
  %810 = vmatpush2.msra.mxu0 %v729
  %811 = vmatprep.subr.mxu0 0.0
  %812 = vmatpush2.msra.mxu0 %v728
  %813 = vmatprep.subr.mxu0 0.0
  %814 = vmatpush2.msra.mxu0 %v727
  %815 = vmatprep.subr.mxu0 0.0
  %816 = vmatpush2.msra.mxu0 %v726
  %817 = vmatprep.subr.mxu0 0.0
  %818 = vmatpush2.msra.mxu0 %v725
  %819 = vmatprep.subr.mxu0 0.0
  %820 = vmatpush2.msra.mxu0 %v724
  %821 = vmatprep.subr.mxu0 0.0
  %822 = vmatpush2.msra.mxu0 %v723
  %823 = vmatprep.mubr.f32.mxu0 %v703
  %824 = vmatmul.mubr.f32.gmra.mxu0 %v701
  %v825 = vpop.f32.mrf.mxu0
  %v826 = vadd.f32 %v758, %v825
  %v827 = vpop.f32.mrf.mxu0
  %828 = vmatprep.mubr.f32.mxu0 %v704
  %829 = vmatmul.mubr.f32.gmra.mxu0 %v702
  %v830 = vpop.f32.mrf.mxu0
  %v831 = vadd.f32 %v758, %v830
  %v832 = vpop.f32.mrf.mxu0
  %833 = vdwg.mxu0
  %834 = vmatprep.subr.mxu0 0.0
  %835 = vmatpush1.msra.mxu0 %v754
  %836 = vmatprep.subr.mxu0 0.0
  %837 = vmatpush1.msra.mxu0 %v753
  %838 = vmatprep.subr.mxu0 0.0
  %839 = vmatpush1.msra.mxu0 %v752
  %840 = vmatprep.subr.mxu0 0.0
  %841 = vmatpush1.msra.mxu0 %v751
  %842 = vmatprep.subr.mxu0 0.0
  %843 = vmatpush1.msra.mxu0 %v750
  %844 = vmatprep.subr.mxu0 0.0
  %845 = vmatpush1.msra.mxu0 %v749
  %846 = vmatprep.subr.mxu0 0.0
  %847 = vmatpush1.msra.mxu0 %v748
  %848 = vmatprep.subr.mxu0 0.0
  %849 = vmatpush1.msra.mxu0 %v747
  %850 = vmatprep.subr.mxu0 0.0
  %851 = vmatpush1.msra.mxu0 %v746
  %852 = vmatprep.subr.mxu0 0.0
  %853 = vmatpush1.msra.mxu0 %v745
  %854 = vmatprep.subr.mxu0 0.0
  %855 = vmatpush1.msra.mxu0 %v744
  %856 = vmatprep.subr.mxu0 0.0
  %857 = vmatpush1.msra.mxu0 %v743
  %858 = vmatprep.subr.mxu0 0.0
  %859 = vmatpush1.msra.mxu0 %v742
  %860 = vmatprep.subr.mxu0 0.0
  %861 = vmatpush1.msra.mxu0 %v741
  %862 = vmatprep.subr.mxu0 0.0
  %863 = vmatpush1.msra.mxu0 %v740
  %864 = vmatprep.subr.mxu0 0.0
  %865 = vmatpush1.msra.mxu0 %v739
  %866 = vmatprep.subr.mxu0 0.0
  %867 = vmatpush2.msra.mxu0 0.0
  %868 = vmatprep.subr.mxu0 0.0
  %869 = vmatpush2.msra.mxu0 0.0
  %870 = vmatprep.subr.mxu0 0.0
  %871 = vmatpush2.msra.mxu0 0.0
  %872 = vmatprep.subr.mxu0 0.0
  %873 = vmatpush2.msra.mxu0 0.0
  %874 = vmatprep.subr.mxu0 0.0
  %875 = vmatpush2.msra.mxu0 0.0
  %876 = vmatprep.subr.mxu0 0.0
  %877 = vmatpush2.msra.mxu0 0.0
  %878 = vmatprep.subr.mxu0 0.0
  %879 = vmatpush2.msra.mxu0 0.0
  %880 = vmatprep.subr.mxu0 0.0
  %881 = vmatpush2.msra.mxu0 0.0
  %882 = vmatprep.subr.mxu0 0.0
  %883 = vmatpush2.msra.mxu0 0.0
  %884 = vmatprep.subr.mxu0 0.0
  %885 = vmatpush2.msra.mxu0 0.0
  %886 = vmatprep.subr.mxu0 0.0
  %887 = vmatpush2.msra.mxu0 0.0
  %888 = vmatprep.subr.mxu0 0.0
  %889 = vmatpush2.msra.mxu0 0.0
  %890 = vmatprep.subr.mxu0 0.0
  %891 = vmatpush2.msra.mxu0 0.0
  %892 = vmatprep.subr.mxu0 0.0
  %893 = vmatpush2.msra.mxu0 0.0
  %894 = vmatprep.subr.mxu0 0.0
  %895 = vmatpush2.msra.mxu0 0.0
  %896 = vmatprep.subr.mxu0 0.0
  %897 = vmatpush2.msra.mxu0 0.0
  %898 = vmatprep.mubr.f32.mxu0 0.0
  %899 = vmatmul.mubr.f32.gmra.mxu0 %v705
  %v900 = vpop.f32.mrf.mxu0
  %v901 = vadd.f32 %v826, %v900
  %v902 = vpop.f32.mrf.mxu0
  %903 = vmatprep.mubr.f32.mxu0 0.0
  %904 = vmatmul.mubr.f32.gmra.mxu0 %v706
  %v905 = vpop.f32.mrf.mxu0
  %v906 = vadd.f32 %v831, %v905
  %v907 = vpop.f32.mrf.mxu0
  %908 = vdwg.mxu0
  %909 = vst [vmem:[%s10] sm:$0xff] %v901
  %910 = vst [vmem:[%s10 + $0x8] sm:$0xff] %v906
  // Predicated region
  $region42: #{resblock2d_forward.1} parent=0 // pred_check
    _
  $region43: #{resblock2d_forward.1} parent=0 // pred_check_branch
    %912 = sbr.rel (0) target = $region45
  $region44: #{resblock2d_forward.1} parent=0 // pred_region
    _
  $region45: #{resblock2d_forward.1} parent=0 // pred_fallthru
    _
  // Predicated region
  $region46: #{resblock2d_forward.1} parent=0 // pred_check
    _
  $region47: #{resblock2d_forward.1} parent=0 // pred_check_branch
    %914 = sbr.rel (0) target = $region49
  $region48: #{resblock2d_forward.1} parent=0 // pred_region
    _
  $region49: #{resblock2d_forward.1} parent=0 // pred_fallthru
    _

</llo_original>
